<compile_context>
chip_gen: v6e
topology: v6e:2x2x1
jax: 0.10.0
libtpu: 0.0.40
codegen_flags: <defaults>
</compile_context>

<pallas_src>
import jax
import jax.numpy as jnp
import numpy as np
from jax.experimental import pallas as pl
from jax.experimental.pallas import tpu as pltpu

NEG_SLOPE = 0.01  # PyTorch nn.LeakyReLU default


def downstage_kernel(x_ref, w1_ref, sh1_ref, w2_ref, sh2_ref, o_ref):
    """Processes one sub-batch of Bt elements, flattened to Nt = Bt*Lp lane columns.

    x_ref  : (1, 2, Ci, Nt)  even/odd pool partners on axis 1, channels on sublanes,
                             flat batch*pooled_length on lanes
    w1_ref : (K, Co, Ci)     conv1 weights, tap-major, BN1 scale pre-folded
    sh1_ref: (Co, 1)         BN1 shift (includes conv1 bias), f32
    w2_ref : (K, Co, Cm)     conv2 weights, tap-major, BN2 scale pre-folded
    sh2_ref: (Co, 1)         BN2 shift (includes conv2 bias), f32
    o_ref  : (1, Co, N2)     output slab, N2 = Nt - 2*(K-1); the K-1 tail columns of every
                             batch segment hold cross-batch junk that the wrapper strips.
    """
    K, Co, Ci = w1_ref.shape
    Nt = x_ref.shape[-1]
    N1 = Nt - (K - 1)
    N2 = N1 - (K - 1)

    # ---- MaxPool1d(2,2): one lane-dense VPU max, no relayout, no strided loads ----
    xpair = x_ref[0]                                  # (2, Ci, Nt)
    xp = jnp.maximum(xpair[0], xpair[1])              # (Ci, Nt)

    # ---- Conv1d #1: one GEMM per tap over the flat batch*length axis, tap-0 init ----
    acc1 = jnp.dot(w1_ref[0], xp[:, 0:N1], preferred_element_type=jnp.float32)
    for k in range(1, K):                             # static unroll, K=3
        acc1 = acc1 + jnp.dot(w1_ref[k], xp[:, k:k + N1],
                              preferred_element_type=jnp.float32)
    y1 = acc1 + sh1_ref[...]                          # BN1 shift (scale folded in w1)
    y1 = jnp.where(y1 > 0, y1, NEG_SLOPE * y1)        # LeakyReLU, f32

    # ---- Conv1d #2 ----
    y1c = y1.astype(w2_ref.dtype)                     # bf16 path: cast for MXU
    acc2 = jnp.dot(w2_ref[0], y1c[:, 0:N2], preferred_element_type=jnp.float32)
    for k in range(1, K):
        acc2 = acc2 + jnp.dot(w2_ref[k], y1c[:, k:k + N2],
                              preferred_element_type=jnp.float32)
    y2 = acc2 + sh2_ref[...]
    y2 = jnp.where(y2 > 0, y2, NEG_SLOPE * y2)

    # Lane-dense store (N2 columns wide); junk boundary columns removed by the wrapper.
    o_ref[0] = y2.astype(o_ref.dtype)


def _pick_batch_block(B, Ci, Co, Lp, x_itemsize, target_bytes=2 << 20):
    """Largest divisor of B whose per-step VMEM working set stays under target_bytes.

    Prefers one big block (grid=(1,)) for small problems: v5e/v6e have a single TensorCore,
    so forcing extra grid steps only adds per-step overhead.  The ~2 MiB target (with 2x
    double-buffering headroom) stays far under the 32 MiB default scoped VMEM even on
    v7x's 64 MiB physical VMEM.
    """
    per_elem = Lp * (2 * Ci * x_itemsize          # split input block
                     + 4 * (Ci + 3 * Co))         # f32 xp / accumulators / y1 / y2 (approx)
    best = 1
    for d in range(1, B + 1):
        if B % d == 0 and 2 * d * per_elem <= target_bytes:
            best = d
    return best


def downstage(x, w1_t, sh1, w2_t, sh2, *, out_dtype=jnp.float32, batch_block=None):
    """DownStage forward.

    x    : (B, Ci, L)   NCL input (f32 or bf16)
    w1_t : (K, Co, Ci)  conv1 weights, tap-major, BN1 scale folded in
    sh1  : (Co, 1)      BN1 shift, f32
    w2_t : (K, Co, Cm)  conv2 weights, tap-major, BN2 scale folded in
    sh2  : (Co, 1)      BN2 shift, f32
    Returns (B, Co, L2) with L2 = L//2 - 2*(K-1).
    """
    B, Ci, L = x.shape
    K, Co, _ = w1_t.shape
    Cm = w2_t.shape[2]
    if L % 2:                         # PyTorch MaxPool1d(2,2) floors: drop trailing sample
        L -= 1
        x = x[:, :, :L]
    Lp = L // 2
    L1 = Lp - (K - 1)
    L2 = L1 - (K - 1)
    assert L2 >= 1, "input length too short for MaxPool(2) + two valid k=3 convs"

    Bt = (batch_block if batch_block is not None
          else _pick_batch_block(B, Ci, Co, Lp, x.dtype.itemsize))
    assert B % Bt == 0
    G = B // Bt
    Nt = Bt * Lp
    N2 = Nt - 2 * (K - 1)

    # Wrapper-side layout plumbing (no compute hoisted): split even/odd pool partners onto
    # a leading axis of 2, channels -> sublanes, batch*pooled_length -> lanes, grid-major.
    xt = (x.reshape(G, Bt, Ci, Lp, 2)
            .transpose(0, 4, 2, 1, 3)            # (G, 2, Ci, Bt, Lp)
            .reshape(G, 2, Ci, Nt))

    out_flat = pl.pallas_call(
        downstage_kernel,
        out_shape=jax.ShapeDtypeStruct((G, Co, N2), out_dtype),
        grid=(G,),
        in_specs=[
            pl.BlockSpec((1, 2, Ci, Nt), lambda g: (g, 0, 0, 0)),
            pl.BlockSpec((K, Co, Ci), lambda g: (0, 0, 0)),
            pl.BlockSpec((Co, 1), lambda g: (0, 0)),
            pl.BlockSpec((K, Co, Cm), lambda g: (0, 0, 0)),
            pl.BlockSpec((Co, 1), lambda g: (0, 0)),
        ],
        out_specs=pl.BlockSpec((1, Co, N2), lambda g: (g, 0, 0)),
        compiler_params=pltpu.CompilerParams(dimension_semantics=("parallel",)),
    )(xt, w1_t, sh1, w2_t, sh2)

    # Strip per-batch-segment junk columns (flat index of valid output j is b_local*Lp + j).
    out = jnp.pad(out_flat, ((0, 0), (0, 0), (0, Nt - N2)))
    out = out.reshape(G, Co, Bt, Lp)[:, :, :, :L2]
    out = out.transpose(0, 2, 1, 3).reshape(B, Co, L2)
    return out


def fold_params(w1, cb1, g1, be1, rm1, rv1, w2, cb2, g2, be2, rm2, rv2, eps,
                compute_dtype=jnp.float32):
    """Fold conv bias + inference-mode BN into scaled weights and per-channel shifts.

    w1, w2: PyTorch layout (Co, Cin, K). Returns tap-major (K, Co, Cin) weights with the BN
    scale folded in (host-side constant fold, zero per-call cost) and (Co, 1) f32 shifts.
    """
    s1 = g1 / jnp.sqrt(rv1 + eps)
    sh1 = be1 + (cb1 - rm1) * s1
    s2 = g2 / jnp.sqrt(rv2 + eps)
    sh2 = be2 + (cb2 - rm2) * s2
    w1_t = jnp.transpose(w1 * s1[:, None, None], (2, 0, 1)).astype(compute_dtype)
    w2_t = jnp.transpose(w2 * s2[:, None, None], (2, 0, 1)).astype(compute_dtype)
    return (w1_t, sh1.reshape(-1, 1).astype(jnp.float32),
            w2_t, sh2.reshape(-1, 1).astype(jnp.float32))


def reference_forward(x, w1, cb1, g1, be1, rm1, rv1, w2, cb2, g2, be2, rm2, rv2, eps):
    """Pure-JAX reference mirroring the PyTorch module (eval mode), f32."""
    B, Ci, L = x.shape
    if L % 2:
        L -= 1
        x = x[:, :, :L]
    xp = jnp.max(x.reshape(B, Ci, L // 2, 2), axis=-1)

    def conv(xin, w, b):   # w: (Co, Cin, K) PyTorch layout; NCH data
        out = jax.lax.conv_general_dilated(
            xin, w, window_strides=(1,), padding="VALID",
            dimension_numbers=("NCH", "OIH", "NCH"))
        return out + b[None, :, None]

    def bn(y, g, be, rm, rv):
        return (y - rm[None, :, None]) / jnp.sqrt(rv + eps)[None, :, None] \
               * g[None, :, None] + be[None, :, None]

    y = conv(xp, w1, cb1)
    y = bn(y, g1, be1, rm1, rv1)
    y = jnp.where(y > 0, y, NEG_SLOPE * y)
    y = conv(y, w2, cb2)
    y = bn(y, g2, be2, rm2, rv2)
    y = jnp.where(y > 0, y, NEG_SLOPE * y)
    return y


if __name__ == "__main__":
    key = jax.random.PRNGKey(0)
    B, Ci, Co, L, K = 8, 4, 8, 64, 3   # DownStage(in_channels=4, out_channels=8); Cm = Co
    eps = 1e-5

    ks = jax.random.split(key, 5)
    x = jax.random.normal(ks[0], (B, Ci, L), jnp.float32)

    # Conv parameters (PyTorch weight layout: (Co, Cin, K)), deterministic init.
    w1 = jax.random.normal(ks[1], (Co, Ci, K), jnp.float32) * (1.0 / (Ci * K) ** 0.5)
    cb1 = jax.random.normal(ks[2], (Co,), jnp.float32) * 0.1
    w2 = jax.random.normal(ks[3], (Co, Co, K), jnp.float32) * (1.0 / (Co * K) ** 0.5)
    cb2 = jax.random.normal(ks[4], (Co,), jnp.float32) * 0.1

    # BatchNorm parameters / running stats (deterministic, non-trivial).
    ar = jnp.arange(Co, dtype=jnp.float32)
    g1, be1, rm1, rv1 = 1.0 + 0.10 * ar, 0.05 * ar, 0.02 * ar, 1.0 + 0.03 * ar
    g2, be2, rm2, rv2 = 1.0 - 0.05 * ar, -0.03 * ar, 0.01 * ar, 1.0 + 0.02 * ar

    ref = reference_forward(x, w1, cb1, g1, be1, rm1, rv1,
                            w2, cb2, g2, be2, rm2, rv2, eps)

    # ---- f32 path (tight check) ----
    w1_t, sh1, w2_t, sh2 = fold_params(w1, cb1, g1, be1, rm1, rv1,
                                       w2, cb2, g2, be2, rm2, rv2, eps,
                                       compute_dtype=jnp.float32)
    out = jax.block_until_ready(downstage(x, w1_t, sh1, w2_t, sh2))
    np.testing.assert_allclose(np.asarray(out), np.asarray(ref), rtol=1e-4, atol=1e-4)

    # ---- bf16 inputs/weights, f32 accumulation + epilogue (loose check, see header note) ----
    w1_tb, sh1b, w2_tb, sh2b = fold_params(w1, cb1, g1, be1, rm1, rv1,
                                           w2, cb2, g2, be2, rm2, rv2, eps,
                                           compute_dtype=jnp.bfloat16)
    out_bf16 = jax.block_until_ready(
        downstage(x.astype(jnp.bfloat16), w1_tb, sh1b, w2_tb, sh2b))
    np.testing.assert_allclose(np.asarray(out_bf16), np.asarray(ref), rtol=1e-1, atol=1e-1)

    print("KERNEL_OK")
</pallas_src>

<mosaic_0001>
module attributes {stable_mosaic.version = 11 : i64} {
  func.func @downstage_kernel(%arg0: i32, %arg1: memref<1x2x4x256xf32, #tpu.memory_space<vmem>>, %arg2: memref<3x8x4xf32, #tpu.memory_space<vmem>>, %arg3: memref<8x1xf32, #tpu.memory_space<vmem>>, %arg4: memref<3x8x8xf32, #tpu.memory_space<vmem>>, %arg5: memref<8x1xf32, #tpu.memory_space<vmem>>, %arg6: memref<1x8x252xf32, #tpu.memory_space<vmem>>) attributes {dimension_semantics = [#tpu.dimension_semantics<parallel>], iteration_bounds = array<i64: 1>, scalar_prefetch = 0 : i64, scratch_operands = 0 : i64, tpu.core_type = #tpu.core_type<tc>, window_params = [{transform_indices = @transform_0, window_bounds = array<i64: 1, 2, 4, 256>}, {pipeline_mode = #tpu.pipeline_mode<synchronous>, transform_indices = @transform_1, window_bounds = array<i64: 3, 8, 4>}, {pipeline_mode = #tpu.pipeline_mode<synchronous>, transform_indices = @transform_2, window_bounds = array<i64: 8, 1>}, {pipeline_mode = #tpu.pipeline_mode<synchronous>, transform_indices = @transform_3, window_bounds = array<i64: 3, 8, 8>}, {pipeline_mode = #tpu.pipeline_mode<synchronous>, transform_indices = @transform_4, window_bounds = array<i64: 8, 1>}, {transform_indices = @transform_5, window_bounds = array<i64: 1, 8, 252>}]} {
    %c0 = arith.constant 0 : index
    %c0_0 = arith.constant 0 : index
    %c0_1 = arith.constant 0 : index
    %c0_2 = arith.constant 0 : index
    %0 = vector.load %arg1[%c0, %c0_0, %c0_1, %c0_2] : memref<1x2x4x256xf32, #tpu.memory_space<vmem>>, vector<1x2x4x256xf32>
    %1 = vector.shape_cast %0 : vector<1x2x4x256xf32> to vector<2x4x256xf32>
    %2 = vector.extract_strided_slice %1 {offsets = [0, 0, 0], sizes = [1, 4, 256], strides = [1, 1, 1]} : vector<2x4x256xf32> to vector<1x4x256xf32>
    %3 = vector.shape_cast %2 : vector<1x4x256xf32> to vector<4x256xf32>
    %4 = vector.extract_strided_slice %1 {offsets = [1, 0, 0], sizes = [1, 4, 256], strides = [1, 1, 1]} : vector<2x4x256xf32> to vector<1x4x256xf32>
    %5 = vector.shape_cast %4 : vector<1x4x256xf32> to vector<4x256xf32>
    %6 = arith.maximumf %3, %5 : vector<4x256xf32>
    %c0_3 = arith.constant 0 : index
    %c0_4 = arith.constant 0 : index
    %c0_5 = arith.constant 0 : index
    %7 = vector.load %arg2[%c0_3, %c0_4, %c0_5] : memref<3x8x4xf32, #tpu.memory_space<vmem>>, vector<1x8x4xf32>
    %8 = vector.shape_cast %7 : vector<1x8x4xf32> to vector<8x4xf32>
    %9 = vector.extract_strided_slice %6 {offsets = [0, 0], sizes = [4, 254], strides = [1, 1]} : vector<4x256xf32> to vector<4x254xf32>
    %cst = arith.constant dense<0.000000e+00> : vector<8x254xf32>
    %10 = tpu.matmul %8, %9, %cst {dimension_numbers = #tpu.dot_dimension_numbers<[1], [0], [0], [1], [0, 0, 1, 1], [], []>} : vector<8x4xf32>, vector<4x254xf32>, vector<8x254xf32> -> vector<8x254xf32>
    %c1 = arith.constant 1 : index
    %c0_6 = arith.constant 0 : index
    %c0_7 = arith.constant 0 : index
    %11 = vector.load %arg2[%c1, %c0_6, %c0_7] : memref<3x8x4xf32, #tpu.memory_space<vmem>>, vector<1x8x4xf32>
    %12 = vector.shape_cast %11 : vector<1x8x4xf32> to vector<8x4xf32>
    %13 = vector.extract_strided_slice %6 {offsets = [0, 1], sizes = [4, 254], strides = [1, 1]} : vector<4x256xf32> to vector<4x254xf32>
    %cst_8 = arith.constant dense<0.000000e+00> : vector<8x254xf32>
    %14 = tpu.matmul %12, %13, %cst_8 {dimension_numbers = #tpu.dot_dimension_numbers<[1], [0], [0], [1], [0, 0, 1, 1], [], []>} : vector<8x4xf32>, vector<4x254xf32>, vector<8x254xf32> -> vector<8x254xf32>
    %15 = arith.addf %10, %14 : vector<8x254xf32>
    %c2 = arith.constant 2 : index
    %c0_9 = arith.constant 0 : index
    %c0_10 = arith.constant 0 : index
    %16 = vector.load %arg2[%c2, %c0_9, %c0_10] : memref<3x8x4xf32, #tpu.memory_space<vmem>>, vector<1x8x4xf32>
    %17 = vector.shape_cast %16 : vector<1x8x4xf32> to vector<8x4xf32>
    %18 = vector.extract_strided_slice %6 {offsets = [0, 2], sizes = [4, 254], strides = [1, 1]} : vector<4x256xf32> to vector<4x254xf32>
    %cst_11 = arith.constant dense<0.000000e+00> : vector<8x254xf32>
    %19 = tpu.matmul %17, %18, %cst_11 {dimension_numbers = #tpu.dot_dimension_numbers<[1], [0], [0], [1], [0, 0, 1, 1], [], []>} : vector<8x4xf32>, vector<4x254xf32>, vector<8x254xf32> -> vector<8x254xf32>
    %20 = arith.addf %15, %19 : vector<8x254xf32>
    %c0_12 = arith.constant 0 : index
    %c0_13 = arith.constant 0 : index
    %21 = vector.load %arg3[%c0_12, %c0_13] : memref<8x1xf32, #tpu.memory_space<vmem>>, vector<8x1xf32>
    %22 = vector.broadcast %21 : vector<8x1xf32> to vector<8x254xf32>
    %23 = arith.addf %20, %22 : vector<8x254xf32>
    %cst_14 = arith.constant 0.000000e+00 : f32
    %24 = vector.broadcast %cst_14 : f32 to vector<8x254xf32>
    %25 = arith.cmpf ogt, %23, %24 : vector<8x254xf32>
    %cst_15 = arith.constant 0.00999999977 : f32
    %26 = vector.broadcast %cst_15 : f32 to vector<8x254xf32>
    %27 = arith.mulf %26, %23 : vector<8x254xf32>
    %28 = arith.select %25, %23, %27 : vector<8x254xi1>, vector<8x254xf32>
    %c0_16 = arith.constant 0 : index
    %c0_17 = arith.constant 0 : index
    %c0_18 = arith.constant 0 : index
    %29 = vector.load %arg4[%c0_16, %c0_17, %c0_18] : memref<3x8x8xf32, #tpu.memory_space<vmem>>, vector<1x8x8xf32>
    %30 = vector.shape_cast %29 : vector<1x8x8xf32> to vector<8x8xf32>
    %31 = vector.extract_strided_slice %28 {offsets = [0, 0], sizes = [8, 252], strides = [1, 1]} : vector<8x254xf32> to vector<8x252xf32>
    %cst_19 = arith.constant dense<0.000000e+00> : vector<8x252xf32>
    %32 = tpu.matmul %30, %31, %cst_19 {dimension_numbers = #tpu.dot_dimension_numbers<[1], [0], [0], [1], [0, 0, 1, 1], [], []>} : vector<8x8xf32>, vector<8x252xf32>, vector<8x252xf32> -> vector<8x252xf32>
    %c1_20 = arith.constant 1 : index
    %c0_21 = arith.constant 0 : index
    %c0_22 = arith.constant 0 : index
    %33 = vector.load %arg4[%c1_20, %c0_21, %c0_22] : memref<3x8x8xf32, #tpu.memory_space<vmem>>, vector<1x8x8xf32>
    %34 = vector.shape_cast %33 : vector<1x8x8xf32> to vector<8x8xf32>
    %35 = vector.extract_strided_slice %28 {offsets = [0, 1], sizes = [8, 252], strides = [1, 1]} : vector<8x254xf32> to vector<8x252xf32>
    %cst_23 = arith.constant dense<0.000000e+00> : vector<8x252xf32>
    %36 = tpu.matmul %34, %35, %cst_23 {dimension_numbers = #tpu.dot_dimension_numbers<[1], [0], [0], [1], [0, 0, 1, 1], [], []>} : vector<8x8xf32>, vector<8x252xf32>, vector<8x252xf32> -> vector<8x252xf32>
    %37 = arith.addf %32, %36 : vector<8x252xf32>
    %c2_24 = arith.constant 2 : index
    %c0_25 = arith.constant 0 : index
    %c0_26 = arith.constant 0 : index
    %38 = vector.load %arg4[%c2_24, %c0_25, %c0_26] : memref<3x8x8xf32, #tpu.memory_space<vmem>>, vector<1x8x8xf32>
    %39 = vector.shape_cast %38 : vector<1x8x8xf32> to vector<8x8xf32>
    %40 = vector.extract_strided_slice %28 {offsets = [0, 2], sizes = [8, 252], strides = [1, 1]} : vector<8x254xf32> to vector<8x252xf32>
    %cst_27 = arith.constant dense<0.000000e+00> : vector<8x252xf32>
    %41 = tpu.matmul %39, %40, %cst_27 {dimension_numbers = #tpu.dot_dimension_numbers<[1], [0], [0], [1], [0, 0, 1, 1], [], []>} : vector<8x8xf32>, vector<8x252xf32>, vector<8x252xf32> -> vector<8x252xf32>
    %42 = arith.addf %37, %41 : vector<8x252xf32>
    %c0_28 = arith.constant 0 : index
    %c0_29 = arith.constant 0 : index
    %43 = vector.load %arg5[%c0_28, %c0_29] : memref<8x1xf32, #tpu.memory_space<vmem>>, vector<8x1xf32>
    %44 = vector.broadcast %43 : vector<8x1xf32> to vector<8x252xf32>
    %45 = arith.addf %42, %44 : vector<8x252xf32>
    %cst_30 = arith.constant 0.000000e+00 : f32
    %46 = vector.broadcast %cst_30 : f32 to vector<8x252xf32>
    %47 = arith.cmpf ogt, %45, %46 : vector<8x252xf32>
    %cst_31 = arith.constant 0.00999999977 : f32
    %48 = vector.broadcast %cst_31 : f32 to vector<8x252xf32>
    %49 = arith.mulf %48, %45 : vector<8x252xf32>
    %50 = arith.select %47, %45, %49 : vector<8x252xi1>, vector<8x252xf32>
    %c0_32 = arith.constant 0 : index
    %c0_33 = arith.constant 0 : index
    %c0_34 = arith.constant 0 : index
    %51 = vector.load %arg6[%c0_32, %c0_33, %c0_34] : memref<1x8x252xf32, #tpu.memory_space<vmem>>, vector<1x8x252xf32>
    %52 = vector.shape_cast %51 : vector<1x8x252xf32> to vector<8x252xf32>
    %53 = vector.shape_cast %50 : vector<8x252xf32> to vector<1x8x252xf32>
    tpu.vector_store %arg6[%c0_32, %c0_33, %c0_34], %53 {strides = array<i32>} : memref<1x8x252xf32, #tpu.memory_space<vmem>>, vector<1x8x252xf32>,
    return
  }
  func.func @transform_0(%arg0: i32) -> (i32, i32, i32, i32) {
    %c0_i32 = arith.constant 0 : i32
    %c0_i32_0 = arith.constant 0 : i32
    %c0_i32_1 = arith.constant 0 : i32
    %c0_i32_2 = arith.constant 0 : i32
    return %arg0, %c0_i32, %c0_i32_0, %c0_i32_1 : i32, i32, i32, i32
  }
  func.func @transform_1(%arg0: i32) -> (i32, i32, i32) {
    %c0_i32 = arith.constant 0 : i32
    %c0_i32_0 = arith.constant 0 : i32
    %c0_i32_1 = arith.constant 0 : i32
    %c0_i32_2 = arith.constant 0 : i32
    return %c0_i32, %c0_i32_0, %c0_i32_1 : i32, i32, i32
  }
  func.func @transform_2(%arg0: i32) -> (i32, i32) {
    %c0_i32 = arith.constant 0 : i32
    %c0_i32_0 = arith.constant 0 : i32
    %c0_i32_1 = arith.constant 0 : i32
    return %c0_i32, %c0_i32_0 : i32, i32
  }
  func.func @transform_3(%arg0: i32) -> (i32, i32, i32) {
    %c0_i32 = arith.constant 0 : i32
    %c0_i32_0 = arith.constant 0 : i32
    %c0_i32_1 = arith.constant 0 : i32
    %c0_i32_2 = arith.constant 0 : i32
    return %c0_i32, %c0_i32_0, %c0_i32_1 : i32, i32, i32
  }
  func.func @transform_4(%arg0: i32) -> (i32, i32) {
    %c0_i32 = arith.constant 0 : i32
    %c0_i32_0 = arith.constant 0 : i32
    %c0_i32_1 = arith.constant 0 : i32
    return %c0_i32, %c0_i32_0 : i32, i32
  }
  func.func @transform_5(%arg0: i32) -> (i32, i32, i32) {
    %c0_i32 = arith.constant 0 : i32
    %c0_i32_0 = arith.constant 0 : i32
    %c0_i32_1 = arith.constant 0 : i32
    return %arg0, %c0_i32, %c0_i32_0 : i32, i32, i32
  }
}

</mosaic_0001>

<llo_original>
// kernel: tpu_custom_call.1
$region0: #{tpu_custom_call.1}
  #allocation0 [shape = 'u32[]', space=smem, size = 0x4, offset = 0x4, fixed_abs, tag = 'smem constant byte address 0x4 - core index']
  #allocation1 [shape = 'u32[144,128]{1,0:T(1,128)}', space=vmem, size = 0x12000, scoped, tag = 'internal scratch']
  %s0 = inlined_call_operand.vmem [shape: f32[1,2,4,256], index: 0, kind: input, shape index: {}]
  %s1 = inlined_call_operand.vmem [shape: f32[3,8,4], index: 1, kind: input, shape index: {}]
  %s2 = inlined_call_operand.vmem [shape: f32[8,1], index: 2, kind: input, shape index: {}]
  %s3 = inlined_call_operand.vmem [shape: f32[3,8,8], index: 3, kind: input, shape index: {}]
  %s4 = inlined_call_operand.vmem [shape: f32[8,1], index: 4, kind: input, shape index: {}]
  %s5 = inlined_call_operand.hbm [shape: f32[1,8,252], index: 5, kind: output, shape index: {}]
  %s6 = sld [smem:[#allocation0]]
  $region30: #{tpu_custom_call.1} parent=0
    _
  %s8 = ssub.s32 1, %s6
  %s9 = scalar_select 0, %s8, %s6
  $region1: #{tpu_custom_call.1} parent=0
    #allocation2 [shape = 'u8[8192]{0}', space=vmem, size = 0x2000, scoped, tag = 'output window, operand 0, single buffered']
    #allocation3 [shape = 's32[1]{0}', space=sflag, size = 0x4, scoped, tag = 'scoped memory for tpu_custom_call.1']
    %10 = vsyncpa [#allocation3], 0
    // Predicated region
    $region2: #{tpu_custom_call.1} parent=1 // pred_check
      _
    $region3: #{tpu_custom_call.1} parent=1 // pred_check_branch
      %12 = sbr.rel (0) target = $region5
    $region4: #{tpu_custom_call.1} parent=1 // pred_region
      _
    $region5: #{tpu_custom_call.1} parent=1 // pred_fallthru
      _
    // Predicated region
    $region6: #{tpu_custom_call.1} parent=1 // pred_check
      _
    $region7: #{tpu_custom_call.1} parent=1 // pred_check_branch
      %14 = sbr.rel (0) target = $region9
    $region8: #{tpu_custom_call.1} parent=1 // pred_region
      _
    $region9: #{tpu_custom_call.1} parent=1 // pred_fallthru
      _
    // Predicated region
    $region10: #{tpu_custom_call.1} parent=1 // pred_check
      _
    $region11: #{tpu_custom_call.1} parent=1 // pred_check_branch
      %16 = sbr.rel (0) target = $region13
    $region12: #{tpu_custom_call.1} parent=1 // pred_region
      _
    $region13: #{tpu_custom_call.1} parent=1 // pred_fallthru
      _
    // Predicated region
    $region14: #{tpu_custom_call.1} parent=1 // pred_check
      _
    $region15: #{tpu_custom_call.1} parent=1 // pred_check_branch
      %18 = sbr.rel (0) target = $region17
    $region16: #{tpu_custom_call.1} parent=1 // pred_region
      _
    $region17: #{tpu_custom_call.1} parent=1 // pred_fallthru
      _
    // Predicated region
    $region18: #{tpu_custom_call.1} parent=1 // pred_check
      _
    $region19: #{tpu_custom_call.1} parent=1 // pred_check_branch
      %20 = sbr.rel (0) target = $region21
    $region20: #{tpu_custom_call.1} parent=1 // pred_region
      _
    $region21: #{tpu_custom_call.1} parent=1 // pred_fallthru
      _
    %v21 = vld [vmem:[%s0] sm:$0xff]
    %v22 = vld [vmem:[%s0 + $0x8] sm:$0xff]
    %v23 = vmax.f32 %v21, %v22
    %v24 = vld [vmem:[%s1] sm:$0xff]
    %s25 = scalar_lea.vmem %s1, 8
    %v26 = vld [vmem:[%s25] sm:$0xff]
    %v28 = vcombine.high %v23, %v23
    %29 = vrot.lane.b32.xlu0 %v23, 127
    %v30 = vpop.permute.xlu0 %29
    %31 = vrot.lane.b32.xlu0 %v28, 127
    %v32 = vpop.permute.xlu0 %31
    %vm33 = vcmask 1039360
    %v34 = vsel %vm33, %v30, %v32
    %vm35 = vcmask 31744
    %v37 = vsel %vm35, %v26, 0
    %vm39 = vcmask 1043456
    %v40 = vsel %vm39, %v34, 0
    %v42 = vsel %vm39, %v32, 0
    %44 = vmatprep.subr.mxu0 0.0
    %45 = vmatpush1.msra.mxu0 0.0
    %46 = vmatprep.subr.mxu0 0.0
    %47 = vmatpush1.msra.mxu0 0.0
    %48 = vmatprep.subr.mxu0 0.0
    %49 = vmatpush1.msra.mxu0 0.0
    %50 = vmatprep.subr.mxu0 0.0
    %51 = vmatpush1.msra.mxu0 0.0
    %52 = vmatprep.subr.mxu0 0.0
    %53 = vmatpush1.msra.mxu0 0.0
    %54 = vmatprep.subr.mxu0 0.0
    %55 = vmatpush1.msra.mxu0 0.0
    %56 = vmatprep.subr.mxu0 0.0
    %57 = vmatpush1.msra.mxu0 0.0
    %58 = vmatprep.subr.mxu0 0.0
    %59 = vmatpush1.msra.mxu0 0.0
    %60 = vmatprep.subr.mxu0 0.0
    %61 = vmatpush1.msra.mxu0 0.0
    %62 = vmatprep.subr.mxu0 0.0
    %63 = vmatpush1.msra.mxu0 0.0
    %64 = vmatprep.subr.mxu0 0.0
    %65 = vmatpush1.msra.mxu0 0.0
    %66 = vmatprep.subr.mxu0 0.0
    %67 = vmatpush1.msra.mxu0 0.0
    %68 = vmatprep.subr.mxu0 0.0
    %69 = vmatpush1.msra.mxu0 0.0
    %70 = vmatprep.subr.mxu0 0.0
    %71 = vmatpush1.msra.mxu0 0.0
    %72 = vmatprep.subr.mxu0 0.0
    %73 = vmatpush1.msra.mxu0 0.0
    %74 = vmatprep.subr.mxu0 %v42
    %75 = vmatpush1.msra.mxu0 %v40
    %76 = vmatprep.subr.mxu0 0.0
    %77 = vmatpush2.msra.mxu0 0.0
    %78 = vmatprep.subr.mxu0 0.0
    %79 = vmatpush2.msra.mxu0 0.0
    %80 = vmatprep.subr.mxu0 0.0
    %81 = vmatpush2.msra.mxu0 0.0
    %82 = vmatprep.subr.mxu0 0.0
    %83 = vmatpush2.msra.mxu0 0.0
    %84 = vmatprep.subr.mxu0 0.0
    %85 = vmatpush2.msra.mxu0 0.0
    %86 = vmatprep.subr.mxu0 0.0
    %87 = vmatpush2.msra.mxu0 0.0
    %88 = vmatprep.subr.mxu0 0.0
    %89 = vmatpush2.msra.mxu0 0.0
    %90 = vmatprep.subr.mxu0 0.0
    %91 = vmatpush2.msra.mxu0 0.0
    %92 = vmatprep.subr.mxu0 0.0
    %93 = vmatpush2.msra.mxu0 0.0
    %94 = vmatprep.subr.mxu0 0.0
    %95 = vmatpush2.msra.mxu0 0.0
    %96 = vmatprep.subr.mxu0 0.0
    %97 = vmatpush2.msra.mxu0 0.0
    %98 = vmatprep.subr.mxu0 0.0
    %99 = vmatpush2.msra.mxu0 0.0
    %100 = vmatprep.subr.mxu0 0.0
    %101 = vmatpush2.msra.mxu0 0.0
    %102 = vmatprep.subr.mxu0 0.0
    %103 = vmatpush2.msra.mxu0 0.0
    %104 = vmatprep.subr.mxu0 0.0
    %105 = vmatpush2.msra.mxu0 0.0
    %106 = vmatprep.subr.mxu0 0.0
    %107 = vmatpush2.msra.mxu0 0.0
    %108 = vmatprep.mubr.f32.mxu0 0.0
    %109 = vmatmul.mubr.f32.gmra.mxu0 %v37
    %v110 = vpop.f32.mrf.mxu0
    %v111 = vadd.f32 0.0, %v110
    %v112 = vpop.f32.mrf.mxu0
    %v113 = vadd.f32 0.0, %v112
    %114 = vdwg.mxu0
    %v116 = vsel %vm35, %v24, 0
    %v118 = vsel %vm39, %v23, 0
    %v120 = vsel %vm39, %v28, 0
    %122 = vmatprep.subr.mxu0 0.0
    %123 = vmatpush1.msra.mxu0 0.0
    %124 = vmatprep.subr.mxu0 0.0
    %125 = vmatpush1.msra.mxu0 0.0
    %126 = vmatprep.subr.mxu0 0.0
    %127 = vmatpush1.msra.mxu0 0.0
    %128 = vmatprep.subr.mxu0 0.0
    %129 = vmatpush1.msra.mxu0 0.0
    %130 = vmatprep.subr.mxu0 0.0
    %131 = vmatpush1.msra.mxu0 0.0
    %132 = vmatprep.subr.mxu0 0.0
    %133 = vmatpush1.msra.mxu0 0.0
    %134 = vmatprep.subr.mxu0 0.0
    %135 = vmatpush1.msra.mxu0 0.0
    %136 = vmatprep.subr.mxu0 0.0
    %137 = vmatpush1.msra.mxu0 0.0
    %138 = vmatprep.subr.mxu0 0.0
    %139 = vmatpush1.msra.mxu0 0.0
    %140 = vmatprep.subr.mxu0 0.0
    %141 = vmatpush1.msra.mxu0 0.0
    %142 = vmatprep.subr.mxu0 0.0
    %143 = vmatpush1.msra.mxu0 0.0
    %144 = vmatprep.subr.mxu0 0.0
    %145 = vmatpush1.msra.mxu0 0.0
    %146 = vmatprep.subr.mxu0 0.0
    %147 = vmatpush1.msra.mxu0 0.0
    %148 = vmatprep.subr.mxu0 0.0
    %149 = vmatpush1.msra.mxu0 0.0
    %150 = vmatprep.subr.mxu0 0.0
    %151 = vmatpush1.msra.mxu0 0.0
    %152 = vmatprep.subr.mxu0 %v120
    %153 = vmatpush1.msra.mxu0 %v118
    %154 = vmatprep.subr.mxu0 0.0
    %155 = vmatpush2.msra.mxu0 0.0
    %156 = vmatprep.subr.mxu0 0.0
    %157 = vmatpush2.msra.mxu0 0.0
    %158 = vmatprep.subr.mxu0 0.0
    %159 = vmatpush2.msra.mxu0 0.0
    %160 = vmatprep.subr.mxu0 0.0
    %161 = vmatpush2.msra.mxu0 0.0
    %162 = vmatprep.subr.mxu0 0.0
    %163 = vmatpush2.msra.mxu0 0.0
    %164 = vmatprep.subr.mxu0 0.0
    %165 = vmatpush2.msra.mxu0 0.0
    %166 = vmatprep.subr.mxu0 0.0
    %167 = vmatpush2.msra.mxu0 0.0
    %168 = vmatprep.subr.mxu0 0.0
    %169 = vmatpush2.msra.mxu0 0.0
    %170 = vmatprep.subr.mxu0 0.0
    %171 = vmatpush2.msra.mxu0 0.0
    %172 = vmatprep.subr.mxu0 0.0
    %173 = vmatpush2.msra.mxu0 0.0
    %174 = vmatprep.subr.mxu0 0.0
    %175 = vmatpush2.msra.mxu0 0.0
    %176 = vmatprep.subr.mxu0 0.0
    %177 = vmatpush2.msra.mxu0 0.0
    %178 = vmatprep.subr.mxu0 0.0
    %179 = vmatpush2.msra.mxu0 0.0
    %180 = vmatprep.subr.mxu0 0.0
    %181 = vmatpush2.msra.mxu0 0.0
    %182 = vmatprep.subr.mxu0 0.0
    %183 = vmatpush2.msra.mxu0 0.0
    %184 = vmatprep.subr.mxu0 0.0
    %185 = vmatpush2.msra.mxu0 0.0
    %186 = vmatprep.mubr.f32.mxu0 0.0
    %187 = vmatmul.mubr.f32.gmra.mxu0 %v116
    %v188 = vpop.f32.mrf.mxu0
    %v189 = vadd.f32 %v111, %v188
    %v190 = vpop.f32.mrf.mxu0
    %v191 = vadd.f32 %v113, %v190
    %192 = vdwg.mxu0
    %s193 = scalar_lea.vmem %s1, 16
    %v194 = vld [vmem:[%s193] sm:$0xff]
    %195 = vrot.lane.b32.xlu0 %v23, 126
    %v196 = vpop.permute.xlu0 %195
    %197 = vrot.lane.b32.xlu0 %v28, 126
    %v198 = vpop.permute.xlu0 %197
    %vm199 = vcmask 1031168
    %v200 = vsel %vm199, %v196, %v198
    %v202 = vsel %vm35, %v194, 0
    %v204 = vsel %vm39, %v200, 0
    %v206 = vsel %vm39, %v198, 0
    %208 = vmatprep.subr.mxu0 0.0
    %209 = vmatpush1.msra.mxu0 0.0
    %210 = vmatprep.subr.mxu0 0.0
    %211 = vmatpush1.msra.mxu0 0.0
    %212 = vmatprep.subr.mxu0 0.0
    %213 = vmatpush1.msra.mxu0 0.0
    %214 = vmatprep.subr.mxu0 0.0
    %215 = vmatpush1.msra.mxu0 0.0
    %216 = vmatprep.subr.mxu0 0.0
    %217 = vmatpush1.msra.mxu0 0.0
    %218 = vmatprep.subr.mxu0 0.0
    %219 = vmatpush1.msra.mxu0 0.0
    %220 = vmatprep.subr.mxu0 0.0
    %221 = vmatpush1.msra.mxu0 0.0
    %222 = vmatprep.subr.mxu0 0.0
    %223 = vmatpush1.msra.mxu0 0.0
    %224 = vmatprep.subr.mxu0 0.0
    %225 = vmatpush1.msra.mxu0 0.0
    %226 = vmatprep.subr.mxu0 0.0
    %227 = vmatpush1.msra.mxu0 0.0
    %228 = vmatprep.subr.mxu0 0.0
    %229 = vmatpush1.msra.mxu0 0.0
    %230 = vmatprep.subr.mxu0 0.0
    %231 = vmatpush1.msra.mxu0 0.0
    %232 = vmatprep.subr.mxu0 0.0
    %233 = vmatpush1.msra.mxu0 0.0
    %234 = vmatprep.subr.mxu0 0.0
    %235 = vmatpush1.msra.mxu0 0.0
    %236 = vmatprep.subr.mxu0 0.0
    %237 = vmatpush1.msra.mxu0 0.0
    %238 = vmatprep.subr.mxu0 %v206
    %239 = vmatpush1.msra.mxu0 %v204
    %240 = vmatprep.subr.mxu0 0.0
    %241 = vmatpush2.msra.mxu0 0.0
    %242 = vmatprep.subr.mxu0 0.0
    %243 = vmatpush2.msra.mxu0 0.0
    %244 = vmatprep.subr.mxu0 0.0
    %245 = vmatpush2.msra.mxu0 0.0
    %246 = vmatprep.subr.mxu0 0.0
    %247 = vmatpush2.msra.mxu0 0.0
    %248 = vmatprep.subr.mxu0 0.0
    %249 = vmatpush2.msra.mxu0 0.0
    %250 = vmatprep.subr.mxu0 0.0
    %251 = vmatpush2.msra.mxu0 0.0
    %252 = vmatprep.subr.mxu0 0.0
    %253 = vmatpush2.msra.mxu0 0.0
    %254 = vmatprep.subr.mxu0 0.0
    %255 = vmatpush2.msra.mxu0 0.0
    %256 = vmatprep.subr.mxu0 0.0
    %257 = vmatpush2.msra.mxu0 0.0
    %258 = vmatprep.subr.mxu0 0.0
    %259 = vmatpush2.msra.mxu0 0.0
    %260 = vmatprep.subr.mxu0 0.0
    %261 = vmatpush2.msra.mxu0 0.0
    %262 = vmatprep.subr.mxu0 0.0
    %263 = vmatpush2.msra.mxu0 0.0
    %264 = vmatprep.subr.mxu0 0.0
    %265 = vmatpush2.msra.mxu0 0.0
    %266 = vmatprep.subr.mxu0 0.0
    %267 = vmatpush2.msra.mxu0 0.0
    %268 = vmatprep.subr.mxu0 0.0
    %269 = vmatpush2.msra.mxu0 0.0
    %270 = vmatprep.subr.mxu0 0.0
    %271 = vmatpush2.msra.mxu0 0.0
    %272 = vmatprep.mubr.f32.mxu0 0.0
    %273 = vmatmul.mubr.f32.gmra.mxu0 %v202
    %v274 = vpop.f32.mrf.mxu0
    %v275 = vadd.f32 0.0, %v274
    %v276 = vpop.f32.mrf.mxu0
    %v277 = vadd.f32 0.0, %v276
    %278 = vdwg.mxu0
    %v279 = vadd.f32 %v189, %v275
    %v280 = vadd.f32 %v191, %v277
    %v281 = vld [vmem:[%s2] sm:$0xff]
    %283 = vset.pattern.permute.xlu0 0
    %284 = vperm.xlu0 %283, %v281
    %v285 = vpop.permute.xlu0 %284
    %v287 = vadd.f32 %v279, %v285
    %v288 = vadd.f32 %v280, %v285
    %vm289 = vcmp.gt.f32.partialorder %v287, 0.0
    %vm290 = vcmp.gt.f32.partialorder %v288, 0.0
    %v291 = vmul.f32 %v287, 0.01
    %v292 = vmul.f32 %v288, 0.01
    %v293 = vsel %vm289, %v287, %v291
    %v294 = vsel %vm290, %v288, %v292
    %v295 = vld [vmem:[%s3] sm:$0xff]
    %s296 = scalar_lea.vmem %s3, 8
    %v297 = vld [vmem:[%s296] sm:$0xff]
    %300 = vrot.lane.b32.xlu0 %v293, 127
    %v301 = vpop.permute.xlu0 %300
    %302 = vrot.lane.b32.xlu0 %v294, 127
    %v303 = vpop.permute.xlu0 %302
    %v304 = vsel %vm33, %v301, %v303
    %vm307 = vcmask 64512
    %v309 = vsel %vm307, %v297, 0
    %311 = vmatprep.subr.mxu0 0.0
    %312 = vmatpush1.msra.mxu0 0.0
    %313 = vmatprep.subr.mxu0 0.0
    %314 = vmatpush1.msra.mxu0 0.0
    %315 = vmatprep.subr.mxu0 0.0
    %316 = vmatpush1.msra.mxu0 0.0
    %317 = vmatprep.subr.mxu0 0.0
    %318 = vmatpush1.msra.mxu0 0.0
    %319 = vmatprep.subr.mxu0 0.0
    %320 = vmatpush1.msra.mxu0 0.0
    %321 = vmatprep.subr.mxu0 0.0
    %322 = vmatpush1.msra.mxu0 0.0
    %323 = vmatprep.subr.mxu0 0.0
    %324 = vmatpush1.msra.mxu0 0.0
    %325 = vmatprep.subr.mxu0 0.0
    %326 = vmatpush1.msra.mxu0 0.0
    %327 = vmatprep.subr.mxu0 0.0
    %328 = vmatpush1.msra.mxu0 0.0
    %329 = vmatprep.subr.mxu0 0.0
    %330 = vmatpush1.msra.mxu0 0.0
    %331 = vmatprep.subr.mxu0 0.0
    %332 = vmatpush1.msra.mxu0 0.0
    %333 = vmatprep.subr.mxu0 0.0
    %334 = vmatpush1.msra.mxu0 0.0
    %335 = vmatprep.subr.mxu0 0.0
    %336 = vmatpush1.msra.mxu0 0.0
    %337 = vmatprep.subr.mxu0 0.0
    %338 = vmatpush1.msra.mxu0 0.0
    %339 = vmatprep.subr.mxu0 0.0
    %340 = vmatpush1.msra.mxu0 0.0
    %341 = vmatprep.subr.mxu0 %v303
    %342 = vmatpush1.msra.mxu0 %v304
    %343 = vmatprep.subr.mxu0 0.0
    %344 = vmatpush2.msra.mxu0 0.0
    %345 = vmatprep.subr.mxu0 0.0
    %346 = vmatpush2.msra.mxu0 0.0
    %347 = vmatprep.subr.mxu0 0.0
    %348 = vmatpush2.msra.mxu0 0.0
    %349 = vmatprep.subr.mxu0 0.0
    %350 = vmatpush2.msra.mxu0 0.0
    %351 = vmatprep.subr.mxu0 0.0
    %352 = vmatpush2.msra.mxu0 0.0
    %353 = vmatprep.subr.mxu0 0.0
    %354 = vmatpush2.msra.mxu0 0.0
    %355 = vmatprep.subr.mxu0 0.0
    %356 = vmatpush2.msra.mxu0 0.0
    %357 = vmatprep.subr.mxu0 0.0
    %358 = vmatpush2.msra.mxu0 0.0
    %359 = vmatprep.subr.mxu0 0.0
    %360 = vmatpush2.msra.mxu0 0.0
    %361 = vmatprep.subr.mxu0 0.0
    %362 = vmatpush2.msra.mxu0 0.0
    %363 = vmatprep.subr.mxu0 0.0
    %364 = vmatpush2.msra.mxu0 0.0
    %365 = vmatprep.subr.mxu0 0.0
    %366 = vmatpush2.msra.mxu0 0.0
    %367 = vmatprep.subr.mxu0 0.0
    %368 = vmatpush2.msra.mxu0 0.0
    %369 = vmatprep.subr.mxu0 0.0
    %370 = vmatpush2.msra.mxu0 0.0
    %371 = vmatprep.subr.mxu0 0.0
    %372 = vmatpush2.msra.mxu0 0.0
    %373 = vmatprep.subr.mxu0 0.0
    %374 = vmatpush2.msra.mxu0 0.0
    %375 = vmatprep.mubr.f32.mxu0 0.0
    %376 = vmatmul.mubr.f32.gmra.mxu0 %v309
    %v377 = vpop.f32.mrf.mxu0
    %v378 = vadd.f32 0.0, %v377
    %v379 = vpop.f32.mrf.mxu0
    %v380 = vadd.f32 0.0, %v379
    %381 = vdwg.mxu0
    %v383 = vsel %vm307, %v295, 0
    %385 = vmatprep.subr.mxu0 0.0
    %386 = vmatpush1.msra.mxu0 0.0
    %387 = vmatprep.subr.mxu0 0.0
    %388 = vmatpush1.msra.mxu0 0.0
    %389 = vmatprep.subr.mxu0 0.0
    %390 = vmatpush1.msra.mxu0 0.0
    %391 = vmatprep.subr.mxu0 0.0
    %392 = vmatpush1.msra.mxu0 0.0
    %393 = vmatprep.subr.mxu0 0.0
    %394 = vmatpush1.msra.mxu0 0.0
    %395 = vmatprep.subr.mxu0 0.0
    %396 = vmatpush1.msra.mxu0 0.0
    %397 = vmatprep.subr.mxu0 0.0
    %398 = vmatpush1.msra.mxu0 0.0
    %399 = vmatprep.subr.mxu0 0.0
    %400 = vmatpush1.msra.mxu0 0.0
    %401 = vmatprep.subr.mxu0 0.0
    %402 = vmatpush1.msra.mxu0 0.0
    %403 = vmatprep.subr.mxu0 0.0
    %404 = vmatpush1.msra.mxu0 0.0
    %405 = vmatprep.subr.mxu0 0.0
    %406 = vmatpush1.msra.mxu0 0.0
    %407 = vmatprep.subr.mxu0 0.0
    %408 = vmatpush1.msra.mxu0 0.0
    %409 = vmatprep.subr.mxu0 0.0
    %410 = vmatpush1.msra.mxu0 0.0
    %411 = vmatprep.subr.mxu0 0.0
    %412 = vmatpush1.msra.mxu0 0.0
    %413 = vmatprep.subr.mxu0 0.0
    %414 = vmatpush1.msra.mxu0 0.0
    %415 = vmatprep.subr.mxu0 %v294
    %416 = vmatpush1.msra.mxu0 %v293
    %417 = vmatprep.subr.mxu0 0.0
    %418 = vmatpush2.msra.mxu0 0.0
    %419 = vmatprep.subr.mxu0 0.0
    %420 = vmatpush2.msra.mxu0 0.0
    %421 = vmatprep.subr.mxu0 0.0
    %422 = vmatpush2.msra.mxu0 0.0
    %423 = vmatprep.subr.mxu0 0.0
    %424 = vmatpush2.msra.mxu0 0.0
    %425 = vmatprep.subr.mxu0 0.0
    %426 = vmatpush2.msra.mxu0 0.0
    %427 = vmatprep.subr.mxu0 0.0
    %428 = vmatpush2.msra.mxu0 0.0
    %429 = vmatprep.subr.mxu0 0.0
    %430 = vmatpush2.msra.mxu0 0.0
    %431 = vmatprep.subr.mxu0 0.0
    %432 = vmatpush2.msra.mxu0 0.0
    %433 = vmatprep.subr.mxu0 0.0
    %434 = vmatpush2.msra.mxu0 0.0
    %435 = vmatprep.subr.mxu0 0.0
    %436 = vmatpush2.msra.mxu0 0.0
    %437 = vmatprep.subr.mxu0 0.0
    %438 = vmatpush2.msra.mxu0 0.0
    %439 = vmatprep.subr.mxu0 0.0
    %440 = vmatpush2.msra.mxu0 0.0
    %441 = vmatprep.subr.mxu0 0.0
    %442 = vmatpush2.msra.mxu0 0.0
    %443 = vmatprep.subr.mxu0 0.0
    %444 = vmatpush2.msra.mxu0 0.0
    %445 = vmatprep.subr.mxu0 0.0
    %446 = vmatpush2.msra.mxu0 0.0
    %447 = vmatprep.subr.mxu0 0.0
    %448 = vmatpush2.msra.mxu0 0.0
    %449 = vmatprep.mubr.f32.mxu0 0.0
    %450 = vmatmul.mubr.f32.gmra.mxu0 %v383
    %v451 = vpop.f32.mrf.mxu0
    %v452 = vadd.f32 %v378, %v451
    %v453 = vpop.f32.mrf.mxu0
    %v454 = vadd.f32 %v380, %v453
    %455 = vdwg.mxu0
    %s456 = scalar_lea.vmem %s3, 16
    %v457 = vld [vmem:[%s456] sm:$0xff]
    %458 = vrot.lane.b32.xlu0 %v293, 126
    %v459 = vpop.permute.xlu0 %458
    %460 = vrot.lane.b32.xlu0 %v294, 126
    %v461 = vpop.permute.xlu0 %460
    %v462 = vsel %vm199, %v459, %v461
    %v466 = vsel %vm307, %v457, 0
    %468 = vmatprep.subr.mxu0 0.0
    %469 = vmatpush1.msra.mxu0 0.0
    %470 = vmatprep.subr.mxu0 0.0
    %471 = vmatpush1.msra.mxu0 0.0
    %472 = vmatprep.subr.mxu0 0.0
    %473 = vmatpush1.msra.mxu0 0.0
    %474 = vmatprep.subr.mxu0 0.0
    %475 = vmatpush1.msra.mxu0 0.0
    %476 = vmatprep.subr.mxu0 0.0
    %477 = vmatpush1.msra.mxu0 0.0
    %478 = vmatprep.subr.mxu0 0.0
    %479 = vmatpush1.msra.mxu0 0.0
    %480 = vmatprep.subr.mxu0 0.0
    %481 = vmatpush1.msra.mxu0 0.0
    %482 = vmatprep.subr.mxu0 0.0
    %483 = vmatpush1.msra.mxu0 0.0
    %484 = vmatprep.subr.mxu0 0.0
    %485 = vmatpush1.msra.mxu0 0.0
    %486 = vmatprep.subr.mxu0 0.0
    %487 = vmatpush1.msra.mxu0 0.0
    %488 = vmatprep.subr.mxu0 0.0
    %489 = vmatpush1.msra.mxu0 0.0
    %490 = vmatprep.subr.mxu0 0.0
    %491 = vmatpush1.msra.mxu0 0.0
    %492 = vmatprep.subr.mxu0 0.0
    %493 = vmatpush1.msra.mxu0 0.0
    %494 = vmatprep.subr.mxu0 0.0
    %495 = vmatpush1.msra.mxu0 0.0
    %496 = vmatprep.subr.mxu0 0.0
    %497 = vmatpush1.msra.mxu0 0.0
    %498 = vmatprep.subr.mxu0 %v461
    %499 = vmatpush1.msra.mxu0 %v462
    %500 = vmatprep.subr.mxu0 0.0
    %501 = vmatpush2.msra.mxu0 0.0
    %502 = vmatprep.subr.mxu0 0.0
    %503 = vmatpush2.msra.mxu0 0.0
    %504 = vmatprep.subr.mxu0 0.0
    %505 = vmatpush2.msra.mxu0 0.0
    %506 = vmatprep.subr.mxu0 0.0
    %507 = vmatpush2.msra.mxu0 0.0
    %508 = vmatprep.subr.mxu0 0.0
    %509 = vmatpush2.msra.mxu0 0.0
    %510 = vmatprep.subr.mxu0 0.0
    %511 = vmatpush2.msra.mxu0 0.0
    %512 = vmatprep.subr.mxu0 0.0
    %513 = vmatpush2.msra.mxu0 0.0
    %514 = vmatprep.subr.mxu0 0.0
    %515 = vmatpush2.msra.mxu0 0.0
    %516 = vmatprep.subr.mxu0 0.0
    %517 = vmatpush2.msra.mxu0 0.0
    %518 = vmatprep.subr.mxu0 0.0
    %519 = vmatpush2.msra.mxu0 0.0
    %520 = vmatprep.subr.mxu0 0.0
    %521 = vmatpush2.msra.mxu0 0.0
    %522 = vmatprep.subr.mxu0 0.0
    %523 = vmatpush2.msra.mxu0 0.0
    %524 = vmatprep.subr.mxu0 0.0
    %525 = vmatpush2.msra.mxu0 0.0
    %526 = vmatprep.subr.mxu0 0.0
    %527 = vmatpush2.msra.mxu0 0.0
    %528 = vmatprep.subr.mxu0 0.0
    %529 = vmatpush2.msra.mxu0 0.0
    %530 = vmatprep.subr.mxu0 0.0
    %531 = vmatpush2.msra.mxu0 0.0
    %532 = vmatprep.mubr.f32.mxu0 0.0
    %533 = vmatmul.mubr.f32.gmra.mxu0 %v466
    %v534 = vpop.f32.mrf.mxu0
    %v535 = vadd.f32 0.0, %v534
    %v536 = vpop.f32.mrf.mxu0
    %v537 = vadd.f32 0.0, %v536
    %538 = vdwg.mxu0
    %v539 = vadd.f32 %v452, %v535
    %v540 = vadd.f32 %v454, %v537
    %v541 = vld [vmem:[%s4] sm:$0xff]
    %543 = vset.pattern.permute.xlu0 0
    %544 = vperm.xlu0 %543, %v541
    %v545 = vpop.permute.xlu0 %544
    %v547 = vadd.f32 %v539, %v545
    %v548 = vadd.f32 %v540, %v545
    %vm549 = vcmp.gt.f32.partialorder %v547, 0.0
    %vm550 = vcmp.gt.f32.partialorder %v548, 0.0
    %v551 = vmul.f32 %v547, 0.01
    %v552 = vmul.f32 %v548, 0.01
    %v553 = vsel %vm549, %v547, %v551
    %v554 = vsel %vm550, %v548, %v552
    %555 = vst [vmem:[#allocation2] sm:$0xff] %v553
    %vm556 = vcmask 1014784
    %557 = vst.msk [vmem:[#allocation2 + $0x8] sm:$0xff] %vm556, %v554
    // Predicated region
    $region22: #{tpu_custom_call.1} parent=1 // pred_check
      _
    $region23: #{tpu_custom_call.1} parent=1 // pred_check_branch
      %559 = sbr.rel (0) target = $region25
    $region24: #{tpu_custom_call.1} parent=1 // pred_region
      %s561 = ssub.s32 256, 256
      %562 = vsyncadd [#allocation3], %s561
      %s564 = sshll.u32 [#allocation2], 4
      %s565 = int_to_ptr.vmem [resolvable:$true] %s564
      %567 = dma.vmem_to_hbm [thread:$0]  %s565, 256, %s5, [#allocation3]
    $region25: #{tpu_custom_call.1} parent=1 // pred_fallthru
      _
    // Predicated region
    $region26: #{tpu_custom_call.1} parent=1 // pred_check
      _
    $region27: #{tpu_custom_call.1} parent=1 // pred_check_branch
      %569 = sbr.rel (0) target = $region29
    $region28: #{tpu_custom_call.1} parent=1 // pred_region
      %570 = dma.done [#allocation3], 256
    $region29: #{tpu_custom_call.1} parent=1 // pred_fallthru
      _
    %571 = vsyncpa [#allocation3], 1

</llo_original>
